<compile_context>
chip_gen: v6e
topology: v6e:2x2x1
jax: 0.10.0
libtpu: 0.0.40
codegen_flags: <defaults>
</compile_context>

<pallas_src>
import functools

import jax
import jax.numpy as jnp
from jax import lax
from jax.experimental import pallas as pl
from jax.experimental.pallas import tpu as pltpu


def _round_up(v, m):
    return (v + m - 1) // m * m


# ---------------------------------------------------------------------------
# Kernel
# ---------------------------------------------------------------------------
def _sa_kernel(xin_ref, w1_ref, b1_ref, w2_ref, b2_ref, out_ref, *,
               clouds, pts, pts_chunk):
    # xin_ref: (clouds, pts, CIN) f32   concatenated [x | pos] per point
    # w1_ref:  (CIN, H1p) bf16, b1_ref: (1, H1p) f32
    # w2_ref:  (H1p, H2p) bf16, b2_ref: (1, H2p) f32
    # out_ref: (clouds, H2p) f32        per-cloud max-pooled features
    h2p = out_ref.shape[-1]
    cin = xin_ref.shape[-1]

    def chunk_pool(xin_f32):
        # xin_f32: (clouds, pc, CIN) f32.  Cast to bf16 at the point of use.
        pc = xin_f32.shape[1]
        lhs = xin_f32.reshape(clouds * pc, cin).astype(w1_ref.dtype)
        h = jnp.dot(lhs, w1_ref[...], preferred_element_type=jnp.float32)
        h = jnp.maximum(h + b1_ref[...], 0.0)                   # (M, H1p) f32
        h2 = jnp.dot(h.astype(w2_ref.dtype), w2_ref[...],
                     preferred_element_type=jnp.float32)        # (M, H2p) f32
        # Layer-2 bias/ReLU are deferred past this max (exact; see module docs).
        return jnp.max(h2.reshape(clouds, pc, h2p), axis=1)     # (clouds, H2p)

    n_chunks = pts // pts_chunk
    if n_chunks == 1:
        pooled = chunk_pool(xin_ref[...])
    else:
        # Chunk the point axis so h/h2 never exist at full M = clouds*pts.
        def body(c, running):
            start = pl.multiple_of(c * pts_chunk, 8)
            blk = xin_ref[:, pl.ds(start, pts_chunk), :]
            return jnp.maximum(running, chunk_pool(blk))
        pooled = lax.fori_loop(
            0, n_chunks, body,
            jnp.full((clouds, h2p), -jnp.inf, dtype=jnp.float32))

    # Deferred layer-2 bias + ReLU on the pooled (clouds, H2p) tile only.
    out_ref[...] = jnp.maximum(pooled + b2_ref[...], 0.0)


# ---------------------------------------------------------------------------
# One-time parameter preparation (hoisted out of the per-call path)
# ---------------------------------------------------------------------------
def prepare_params(params, *, lane=128):
    """Pad hidden/output dims to `lane`, cast weights to bf16. Call once."""
    w1, b1, w2, b2 = params
    cin, h1 = w1.shape
    h2 = w2.shape[1]
    h1p, h2p = _round_up(h1, lane), _round_up(h2, lane)
    w1p = jnp.pad(w1.astype(jnp.float32),
                  ((0, 0), (0, h1p - h1))).astype(jnp.bfloat16)
    b1p = jnp.pad(b1.reshape(1, -1).astype(jnp.float32),
                  ((0, 0), (0, h1p - h1)))
    w2p = jnp.pad(w2.astype(jnp.float32),
                  ((0, h1p - h1), (0, h2p - h2))).astype(jnp.bfloat16)
    b2p = jnp.pad(b2.reshape(1, -1).astype(jnp.float32),
                  ((0, 0), (0, h2p - h2)))
    return dict(w1=w1p, b1=b1p, w2=w2p, b2=b2p, cin=cin, h2=h2)


# ---------------------------------------------------------------------------
# Tiling heuristics
# ---------------------------------------------------------------------------
def _default_target_steps():
    # v7x: 2 TensorCores/chip -> prefer 2 balanced "parallel" grid steps.
    # v5e/v6e: 1 TC -> extra grid steps are pure serialisation overhead.
    try:
        kind = jax.devices()[0].device_kind.lower()
    except Exception:
        return 1
    return 2 if "v7" in kind else 1


def _pts_chunk(bt, p, h1p, h2p, max_interm_bytes=4 << 20):
    """Largest 8-aligned divisor of P keeping f32 intermediates bounded."""
    cap_rows = max(8, max_interm_bytes // ((h1p + h2p) * 4))
    if bt * p <= cap_rows or p % 8 != 0:
        return p
    best = p
    for d in range(p, 0, -1):
        if p % d == 0 and d % 8 == 0:
            best = d
            if bt * d <= cap_rows:
                return d
    return best


def _choose_clouds_per_step(b, p, cin, h1p, h2p, target_steps, vmem_budget):
    weights = (cin * h1p + h1p * h2p) * 2 + (h1p + h2p) * 4

    def footprint(bt):
        pc = _pts_chunk(bt, p, h1p, h2p)
        return (2 * bt * p * cin * 4          # double-buffered input tile (f32)
                + weights
                + bt * pc * (h1p + h2p) * 4   # live f32 intermediates h, h2
                + 2 * bt * h2p * 4)           # double-buffered output tile

    cands = [d for d in range(b, 0, -1)
             if b % d == 0 and (d == b or d % 8 == 0)]
    for prefer_balanced in (True, False):
        for bt in cands:
            steps = b // bt
            if steps < target_steps and bt != cands[-1]:
                continue
            if prefer_balanced and target_steps > 1 and steps % target_steps:
                continue
            if footprint(bt) <= vmem_budget:
                return bt
    return cands[-1]


# ---------------------------------------------------------------------------
# Forward
# ---------------------------------------------------------------------------
def global_set_abstraction(x, pos, batch, prepared, *, num_clouds,
                           clouds_per_step=None, target_steps=None,
                           vmem_budget_bytes=12 << 20):
    """x: [N, C], pos: [N, 3], batch: [N] (sorted, equal-sized clouds).

    `num_clouds` is static. Returns (pooled [B, H2], pos_out [B, 3],
    batch_out [B]) matching the PyTorch module's forward.
    """
    # TODO(synk): ragged clouds (unequal points per batch id) would need
    # scalar-prefetched per-cloud offsets/lengths; here `batch` is sorted and
    # equal-sized, so it is implied by the row ordering.
    del batch
    N, C = x.shape
    B = num_clouds
    assert N % B == 0, "equal-sized clouds expected"
    P = N // B
    CIN = C + pos.shape[1]
    w1p, b1p, w2p, b2p = (prepared["w1"], prepared["b1"],
                          prepared["w2"], prepared["b2"])
    H2 = prepared["h2"]
    assert w1p.shape[0] == CIN
    H1p, H2p = w1p.shape[1], w2p.shape[1]

    if target_steps is None:
        target_steps = _default_target_steps()
    if clouds_per_step is None:
        Bt = _choose_clouds_per_step(B, P, CIN, H1p, H2p, target_steps,
                                     vmem_budget_bytes)
    else:
        Bt = clouds_per_step
        assert B % Bt == 0 and (Bt == B or Bt % 8 == 0)
    pts_chunk = _pts_chunk(Bt, P, H1p, H2p)

    # Single f32 concat (as the PyTorch module does); bf16 cast happens in-kernel.
    xin = jnp.concatenate([x.astype(jnp.float32), pos.astype(jnp.float32)],
                          axis=1).reshape(B, P, CIN)

    kernel = functools.partial(_sa_kernel, clouds=Bt, pts=P,
                               pts_chunk=pts_chunk)
    out = pl.pallas_call(
        kernel,
        out_shape=jax.ShapeDtypeStruct((B, H2p), jnp.float32),
        grid_spec=pltpu.PrefetchScalarGridSpec(
            num_scalar_prefetch=0,
            grid=(B // Bt,),
            in_specs=[
                pl.BlockSpec((Bt, P, CIN), lambda i: (i, 0, 0)),
                # Constant index maps -> weights stay resident in VMEM.
                pl.BlockSpec(w1p.shape, lambda i: (0, 0)),
                pl.BlockSpec(b1p.shape, lambda i: (0, 0)),
                pl.BlockSpec(w2p.shape, lambda i: (0, 0)),
                pl.BlockSpec(b2p.shape, lambda i: (0, 0)),
            ],
            out_specs=pl.BlockSpec((Bt, H2p), lambda i: (i, 0)),
        ),
        compiler_params=pltpu.CompilerParams(
            dimension_semantics=("parallel",)),
    )(xin, w1p, b1p, w2p, b2p)

    pooled = out[:, :H2]
    pos_out = jnp.zeros((B, 3), dtype=pos.dtype)
    batch_out = jnp.arange(B, dtype=jnp.int32)
    return pooled, pos_out, batch_out


# ---------------------------------------------------------------------------
# References
# ---------------------------------------------------------------------------
def _reference_mixed(x, pos, params, num_clouds):
    # Same bf16-MXU / f32-accumulate recipe as the kernel.
    w1, b1, w2, b2 = params
    xin = jnp.concatenate([x, pos], axis=1)
    h = jnp.dot(xin.astype(jnp.bfloat16), w1.astype(jnp.bfloat16),
                preferred_element_type=jnp.float32)
    h = jnp.maximum(h + b1, 0.0)
    h2 = jnp.dot(h.astype(jnp.bfloat16), w2.astype(jnp.bfloat16),
                 preferred_element_type=jnp.float32)
    h2 = jnp.maximum(h2 + b2, 0.0)
    P = x.shape[0] // num_clouds
    return jnp.max(h2.reshape(num_clouds, P, -1), axis=1)


def _reference_f32(x, pos, params, num_clouds):
    w1, b1, w2, b2 = params
    xin = jnp.concatenate([x, pos], axis=1).astype(jnp.float32)
    h = jnp.maximum(xin @ w1 + b1, 0.0)
    h2 = jnp.maximum(h @ w2 + b2, 0.0)
    P = x.shape[0] // num_clouds
    return jnp.max(h2.reshape(num_clouds, P, -1), axis=1)


if __name__ == "__main__":
    key = jax.random.PRNGKey(0)
    k1, k2, k3, k4, k5, k6 = jax.random.split(key, 6)

    # Small shapes: B point clouds of P points each, C features per point.
    B, P, C = 32, 16, 4
    H1, H2 = 32, 64
    N = B * P
    CIN = C + 3

    x = jax.random.normal(k1, (N, C), dtype=jnp.float32)
    pos = jax.random.normal(k2, (N, 3), dtype=jnp.float32)
    batch = jnp.repeat(jnp.arange(B, dtype=jnp.int32), P)

    # Deterministic MLP parameters (the `nn` passed to the module):
    # Linear(CIN, H1) -> ReLU -> Linear(H1, H2) -> ReLU
    w1 = 0.1 * jax.random.normal(k3, (CIN, H1), dtype=jnp.float32)
    b1 = 0.1 * jax.random.normal(k4, (H1,), dtype=jnp.float32)
    w2 = 0.1 * jax.random.normal(k5, (H1, H2), dtype=jnp.float32)
    b2 = 0.1 * jax.random.normal(k6, (H2,), dtype=jnp.float32)
    params = (w1, b1, w2, b2)

    prepared = prepare_params(params)   # one-time weight padding/casting
    pooled, pos_out, batch_out = global_set_abstraction(
        x, pos, batch, prepared, num_clouds=B)
    jax.block_until_ready((pooled, pos_out, batch_out))

    assert pooled.shape == (B, H2)
    assert pos_out.shape == (B, 3)
    assert batch_out.shape == (B,)

    ref_mixed = _reference_mixed(x, pos, params, B)   # same bf16/f32 recipe
    ref_full = _reference_f32(x, pos, params, B)      # pure-f32 PyTorch math
    assert jnp.allclose(pooled, ref_mixed, atol=1e-3, rtol=1e-3), float(
        jnp.max(jnp.abs(pooled - ref_mixed)))
    assert jnp.allclose(pooled, ref_full, atol=5e-2, rtol=5e-2), float(
        jnp.max(jnp.abs(pooled - ref_full)))

    print("KERNEL_OK")
</pallas_src>

<mosaic_0001>
module attributes {stable_mosaic.version = 11 : i64} {
  func.func @_sa_kernel(%arg0: i32, %arg1: memref<32x16x7xf32, #tpu.memory_space<vmem>>, %arg2: memref<7x128xbf16, #tpu.memory_space<vmem>>, %arg3: memref<1x128xf32, #tpu.memory_space<vmem>>, %arg4: memref<128x128xbf16, #tpu.memory_space<vmem>>, %arg5: memref<1x128xf32, #tpu.memory_space<vmem>>, %arg6: memref<32x128xf32, #tpu.memory_space<vmem>>) attributes {dimension_semantics = [#tpu.dimension_semantics<parallel>], iteration_bounds = array<i64: 1>, scalar_prefetch = 0 : i64, scratch_operands = 0 : i64, tpu.core_type = #tpu.core_type<tc>, window_params = [{transform_indices = @transform_0, window_bounds = array<i64: 32, 16, 7>}, {pipeline_mode = #tpu.pipeline_mode<synchronous>, transform_indices = @transform_1, window_bounds = array<i64: 7, 128>}, {pipeline_mode = #tpu.pipeline_mode<synchronous>, transform_indices = @transform_2, window_bounds = array<i64: 1, 128>}, {pipeline_mode = #tpu.pipeline_mode<synchronous>, transform_indices = @transform_3, window_bounds = array<i64: 128, 128>}, {pipeline_mode = #tpu.pipeline_mode<synchronous>, transform_indices = @transform_4, window_bounds = array<i64: 1, 128>}, {transform_indices = @transform_5, window_bounds = array<i64: 32, 128>}]} {
    %c0 = arith.constant 0 : index
    %c0_0 = arith.constant 0 : index
    %c0_1 = arith.constant 0 : index
    %0 = vector.load %arg1[%c0, %c0_0, %c0_1] : memref<32x16x7xf32, #tpu.memory_space<vmem>>, vector<32x16x7xf32>
    %1 = vector.shape_cast %0 : vector<32x16x7xf32> to vector<512x7xf32>
    %2 = arith.truncf %1 : vector<512x7xf32> to vector<512x7xbf16>
    %c0_2 = arith.constant 0 : index
    %c0_3 = arith.constant 0 : index
    %3 = vector.load %arg2[%c0_2, %c0_3] : memref<7x128xbf16, #tpu.memory_space<vmem>>, vector<7x128xbf16>
    %cst = arith.constant dense<0.000000e+00> : vector<512x128xf32>
    %4 = tpu.matmul %2, %3, %cst {dimension_numbers = #tpu.dot_dimension_numbers<[1], [0], [0], [1], [0, 0, 1, 1], [], []>} : vector<512x7xbf16>, vector<7x128xbf16>, vector<512x128xf32> -> vector<512x128xf32>
    %c0_4 = arith.constant 0 : index
    %c0_5 = arith.constant 0 : index
    %5 = vector.load %arg3[%c0_4, %c0_5] : memref<1x128xf32, #tpu.memory_space<vmem>>, vector<1x128xf32>
    %6 = vector.broadcast %5 : vector<1x128xf32> to vector<512x128xf32>
    %7 = arith.addf %4, %6 : vector<512x128xf32>
    %cst_6 = arith.constant 0.000000e+00 : f32
    %8 = vector.broadcast %cst_6 : f32 to vector<512x128xf32>
    %9 = arith.maximumf %7, %8 : vector<512x128xf32>
    %10 = arith.truncf %9 : vector<512x128xf32> to vector<512x128xbf16>
    %c0_7 = arith.constant 0 : index
    %c0_8 = arith.constant 0 : index
    %11 = vector.load %arg4[%c0_7, %c0_8] : memref<128x128xbf16, #tpu.memory_space<vmem>>, vector<128x128xbf16>
    %cst_9 = arith.constant dense<0.000000e+00> : vector<512x128xf32>
    %12 = tpu.matmul %10, %11, %cst_9 {dimension_numbers = #tpu.dot_dimension_numbers<[1], [0], [0], [1], [0, 0, 1, 1], [], []>} : vector<512x128xbf16>, vector<128x128xbf16>, vector<512x128xf32> -> vector<512x128xf32>
    %13 = vector.shape_cast %12 : vector<512x128xf32> to vector<32x16x128xf32>
    %cst_10 = arith.constant dense<0xFF800000> : vector<32x128xf32>
    %14 = vector.multi_reduction <maximumf>, %13, %cst_10 [1] : vector<32x16x128xf32> to vector<32x128xf32>
    %c0_11 = arith.constant 0 : index
    %c0_12 = arith.constant 0 : index
    %15 = vector.load %arg5[%c0_11, %c0_12] : memref<1x128xf32, #tpu.memory_space<vmem>>, vector<1x128xf32>
    %16 = vector.broadcast %15 : vector<1x128xf32> to vector<32x128xf32>
    %17 = arith.addf %14, %16 : vector<32x128xf32>
    %cst_13 = arith.constant 0.000000e+00 : f32
    %18 = vector.broadcast %cst_13 : f32 to vector<32x128xf32>
    %19 = arith.maximumf %17, %18 : vector<32x128xf32>
    %c0_14 = arith.constant 0 : index
    %c0_15 = arith.constant 0 : index
    %20 = vector.load %arg6[%c0_14, %c0_15] : memref<32x128xf32, #tpu.memory_space<vmem>>, vector<32x128xf32>
    tpu.vector_store %arg6[%c0_14, %c0_15], %19 {strides = array<i32>} : memref<32x128xf32, #tpu.memory_space<vmem>>, vector<32x128xf32>,
    return
  }
  func.func @transform_0(%arg0: i32) -> (i32, i32, i32) {
    %c0_i32 = arith.constant 0 : i32
    %c0_i32_0 = arith.constant 0 : i32
    %c0_i32_1 = arith.constant 0 : i32
    return %arg0, %c0_i32, %c0_i32_0 : i32, i32, i32
  }
  func.func @transform_1(%arg0: i32) -> (i32, i32) {
    %c0_i32 = arith.constant 0 : i32
    %c0_i32_0 = arith.constant 0 : i32
    %c0_i32_1 = arith.constant 0 : i32
    return %c0_i32, %c0_i32_0 : i32, i32
  }
  func.func @transform_2(%arg0: i32) -> (i32, i32) {
    %c0_i32 = arith.constant 0 : i32
    %c0_i32_0 = arith.constant 0 : i32
    %c0_i32_1 = arith.constant 0 : i32
    return %c0_i32, %c0_i32_0 : i32, i32
  }
  func.func @transform_3(%arg0: i32) -> (i32, i32) {
    %c0_i32 = arith.constant 0 : i32
    %c0_i32_0 = arith.constant 0 : i32
    %c0_i32_1 = arith.constant 0 : i32
    return %c0_i32, %c0_i32_0 : i32, i32
  }
  func.func @transform_4(%arg0: i32) -> (i32, i32) {
    %c0_i32 = arith.constant 0 : i32
    %c0_i32_0 = arith.constant 0 : i32
    %c0_i32_1 = arith.constant 0 : i32
    return %c0_i32, %c0_i32_0 : i32, i32
  }
  func.func @transform_5(%arg0: i32) -> (i32, i32) {
    %c0_i32 = arith.constant 0 : i32
    %c0_i32_0 = arith.constant 0 : i32
    return %arg0, %c0_i32 : i32, i32
  }
}

</mosaic_0001>

<llo_original>
// kernel: tpu_custom_call.1
$region0: #{tpu_custom_call.1}
  #allocation0 [shape = 'u32[]', space=smem, size = 0x4, offset = 0x4, fixed_abs, tag = 'smem constant byte address 0x4 - core index']
  #allocation1 [shape = 'u32[144,128]{1,0:T(1,128)}', space=vmem, size = 0x12000, scoped, tag = 'internal scratch']
  %s0 = inlined_call_operand.vmem [shape: f32[32,16,7], index: 0, kind: input, shape index: {}]
  %s1 = inlined_call_operand.vmem [shape: bf16[7,128], index: 1, kind: input, shape index: {}]
  %s2 = inlined_call_operand.vmem [shape: f32[1,128], index: 2, kind: input, shape index: {}]
  %s3 = inlined_call_operand.vmem [shape: bf16[128,128], index: 3, kind: input, shape index: {}]
  %s4 = inlined_call_operand.vmem [shape: f32[1,128], index: 4, kind: input, shape index: {}]
  %s5 = inlined_call_operand.hbm [shape: f32[32,128], index: 5, kind: output, shape index: {}]
  %s6 = sld [smem:[#allocation0]]
  $region30: #{tpu_custom_call.1} parent=0
    _
  %s8 = ssub.s32 1, %s6
  %s9 = scalar_select 0, %s8, %s6
  $region1: #{tpu_custom_call.1} parent=0
    #allocation2 [shape = 'u8[16384]{0}', space=vmem, size = 0x4000, scoped, tag = 'output window, operand 0, single buffered']
    #allocation3 [shape = 's32[1]{0}', space=sflag, size = 0x4, scoped, tag = 'scoped memory for tpu_custom_call.1']
    %10 = vsyncpa [#allocation3], 0
    // Predicated region
    $region2: #{tpu_custom_call.1} parent=1 // pred_check
      _
    $region3: #{tpu_custom_call.1} parent=1 // pred_check_branch
      %12 = sbr.rel (0) target = $region5
    $region4: #{tpu_custom_call.1} parent=1 // pred_region
      _
    $region5: #{tpu_custom_call.1} parent=1 // pred_fallthru
      _
    // Predicated region
    $region6: #{tpu_custom_call.1} parent=1 // pred_check
      _
    $region7: #{tpu_custom_call.1} parent=1 // pred_check_branch
      %14 = sbr.rel (0) target = $region9
    $region8: #{tpu_custom_call.1} parent=1 // pred_region
      _
    $region9: #{tpu_custom_call.1} parent=1 // pred_fallthru
      _
    // Predicated region
    $region10: #{tpu_custom_call.1} parent=1 // pred_check
      _
    $region11: #{tpu_custom_call.1} parent=1 // pred_check_branch
      %16 = sbr.rel (0) target = $region13
    $region12: #{tpu_custom_call.1} parent=1 // pred_region
      _
    $region13: #{tpu_custom_call.1} parent=1 // pred_fallthru
      _
    // Predicated region
    $region14: #{tpu_custom_call.1} parent=1 // pred_check
      _
    $region15: #{tpu_custom_call.1} parent=1 // pred_check_branch
      %18 = sbr.rel (0) target = $region17
    $region16: #{tpu_custom_call.1} parent=1 // pred_region
      _
    $region17: #{tpu_custom_call.1} parent=1 // pred_fallthru
      _
    // Predicated region
    $region18: #{tpu_custom_call.1} parent=1 // pred_check
      _
    $region19: #{tpu_custom_call.1} parent=1 // pred_check_branch
      %20 = sbr.rel (0) target = $region21
    $region20: #{tpu_custom_call.1} parent=1 // pred_region
      _
    $region21: #{tpu_custom_call.1} parent=1 // pred_fallthru
      _
    %v22 = vld [vmem:[%s0] sm:$0xff]
    %v23 = vld [vmem:[%s0 + $0x8] sm:$0xff]
    %v24 = vld [vmem:[%s0 + $0x10] sm:$0xff]
    %v25 = vld [vmem:[%s0 + $0x18] sm:$0xff]
    %v26 = vld [vmem:[%s0 + $0x20] sm:$0xff]
    %v27 = vld [vmem:[%s0 + $0x28] sm:$0xff]
    %v28 = vld [vmem:[%s0 + $0x30] sm:$0xff]
    %v29 = vld [vmem:[%s0 + $0x38] sm:$0xff]
    %v30 = vld [vmem:[%s0 + $0x40] sm:$0xff]
    %v31 = vld [vmem:[%s0 + $0x48] sm:$0xff]
    %v32 = vld [vmem:[%s0 + $0x50] sm:$0xff]
    %v33 = vld [vmem:[%s0 + $0x58] sm:$0xff]
    %v34 = vld [vmem:[%s0 + $0x60] sm:$0xff]
    %v35 = vld [vmem:[%s0 + $0x68] sm:$0xff]
    %v36 = vld [vmem:[%s0 + $0x70] sm:$0xff]
    %v37 = vld [vmem:[%s0 + $0x78] sm:$0xff]
    %v38 = vld [vmem:[%s0 + $0x80] sm:$0xff]
    %v39 = vld [vmem:[%s0 + $0x88] sm:$0xff]
    %v40 = vld [vmem:[%s0 + $0x90] sm:$0xff]
    %v41 = vld [vmem:[%s0 + $0x98] sm:$0xff]
    %v42 = vld [vmem:[%s0 + $0xa0] sm:$0xff]
    %v43 = vld [vmem:[%s0 + $0xa8] sm:$0xff]
    %v44 = vld [vmem:[%s0 + $0xb0] sm:$0xff]
    %v45 = vld [vmem:[%s0 + $0xb8] sm:$0xff]
    %v46 = vld [vmem:[%s0 + $0xc0] sm:$0xff]
    %v47 = vld [vmem:[%s0 + $0xc8] sm:$0xff]
    %v48 = vld [vmem:[%s0 + $0xd0] sm:$0xff]
    %v49 = vld [vmem:[%s0 + $0xd8] sm:$0xff]
    %v50 = vld [vmem:[%s0 + $0xe0] sm:$0xff]
    %v51 = vld [vmem:[%s0 + $0xe8] sm:$0xff]
    %v52 = vld [vmem:[%s0 + $0xf0] sm:$0xff]
    %v53 = vld [vmem:[%s0 + $0xf8] sm:$0xff]
    %v54 = vld [vmem:[%s0 + $0x100] sm:$0xff]
    %v55 = vld [vmem:[%s0 + $0x108] sm:$0xff]
    %v56 = vld [vmem:[%s0 + $0x110] sm:$0xff]
    %v57 = vld [vmem:[%s0 + $0x118] sm:$0xff]
    %v58 = vld [vmem:[%s0 + $0x120] sm:$0xff]
    %v59 = vld [vmem:[%s0 + $0x128] sm:$0xff]
    %v60 = vld [vmem:[%s0 + $0x130] sm:$0xff]
    %v61 = vld [vmem:[%s0 + $0x138] sm:$0xff]
    %v62 = vld [vmem:[%s0 + $0x140] sm:$0xff]
    %v63 = vld [vmem:[%s0 + $0x148] sm:$0xff]
    %v64 = vld [vmem:[%s0 + $0x150] sm:$0xff]
    %v65 = vld [vmem:[%s0 + $0x158] sm:$0xff]
    %v66 = vld [vmem:[%s0 + $0x160] sm:$0xff]
    %v67 = vld [vmem:[%s0 + $0x168] sm:$0xff]
    %v68 = vld [vmem:[%s0 + $0x170] sm:$0xff]
    %v69 = vld [vmem:[%s0 + $0x178] sm:$0xff]
    %v70 = vld [vmem:[%s0 + $0x180] sm:$0xff]
    %v71 = vld [vmem:[%s0 + $0x188] sm:$0xff]
    %v72 = vld [vmem:[%s0 + $0x190] sm:$0xff]
    %v73 = vld [vmem:[%s0 + $0x198] sm:$0xff]
    %v74 = vld [vmem:[%s0 + $0x1a0] sm:$0xff]
    %v75 = vld [vmem:[%s0 + $0x1a8] sm:$0xff]
    %v76 = vld [vmem:[%s0 + $0x1b0] sm:$0xff]
    %v77 = vld [vmem:[%s0 + $0x1b8] sm:$0xff]
    %v78 = vld [vmem:[%s0 + $0x1c0] sm:$0xff]
    %v79 = vld [vmem:[%s0 + $0x1c8] sm:$0xff]
    %v80 = vld [vmem:[%s0 + $0x1d0] sm:$0xff]
    %v81 = vld [vmem:[%s0 + $0x1d8] sm:$0xff]
    %v82 = vld [vmem:[%s0 + $0x1e0] sm:$0xff]
    %v83 = vld [vmem:[%s0 + $0x1e8] sm:$0xff]
    %v84 = vld [vmem:[%s0 + $0x1f0] sm:$0xff]
    %v85 = vld [vmem:[%s0 + $0x1f8] sm:$0xff]
    %v86 = vpack.c.bf16 %v23, %v22
    %v87 = vpack.c.bf16 %v25, %v24
    %v88 = vpack.c.bf16 %v27, %v26
    %v89 = vpack.c.bf16 %v29, %v28
    %v90 = vpack.c.bf16 %v31, %v30
    %v91 = vpack.c.bf16 %v33, %v32
    %v92 = vpack.c.bf16 %v35, %v34
    %v93 = vpack.c.bf16 %v37, %v36
    %v94 = vpack.c.bf16 %v39, %v38
    %v95 = vpack.c.bf16 %v41, %v40
    %v96 = vpack.c.bf16 %v43, %v42
    %v97 = vpack.c.bf16 %v45, %v44
    %v98 = vpack.c.bf16 %v47, %v46
    %v99 = vpack.c.bf16 %v49, %v48
    %v100 = vpack.c.bf16 %v51, %v50
    %v101 = vpack.c.bf16 %v53, %v52
    %v102 = vpack.c.bf16 %v55, %v54
    %v103 = vpack.c.bf16 %v57, %v56
    %v104 = vpack.c.bf16 %v59, %v58
    %v105 = vpack.c.bf16 %v61, %v60
    %v106 = vpack.c.bf16 %v63, %v62
    %v107 = vpack.c.bf16 %v65, %v64
    %v108 = vpack.c.bf16 %v67, %v66
    %v109 = vpack.c.bf16 %v69, %v68
    %v110 = vpack.c.bf16 %v71, %v70
    %v111 = vpack.c.bf16 %v73, %v72
    %v112 = vpack.c.bf16 %v75, %v74
    %v113 = vpack.c.bf16 %v77, %v76
    %v114 = vpack.c.bf16 %v79, %v78
    %v115 = vpack.c.bf16 %v81, %v80
    %v116 = vpack.c.bf16 %v83, %v82
    %v117 = vpack.c.bf16 %v85, %v84
    %v118 = vld [vmem:[%s1] sm:$0xf]
    %v119 = vld [vmem:[%s2] sm:$0x1]
    %v121 = vlaneseq
    %v122 = vshrl.u32 %v121, 7
    %v123 = vsub.s32 0, %v122
    %v124 = vrot.slane %v119, %v123
    %vm126 = vcmask 56320
    %v128 = vsel %vm126, %v86, 0
    %v131 = vsel %vm126, %v87, 0
    %v134 = vsel %vm126, %v88, 0
    %v137 = vsel %vm126, %v89, 0
    %v140 = vsel %vm126, %v90, 0
    %v143 = vsel %vm126, %v91, 0
    %v146 = vsel %vm126, %v92, 0
    %v149 = vsel %vm126, %v93, 0
    %v152 = vsel %vm126, %v94, 0
    %v155 = vsel %vm126, %v95, 0
    %v158 = vsel %vm126, %v96, 0
    %v161 = vsel %vm126, %v97, 0
    %v164 = vsel %vm126, %v98, 0
    %v167 = vsel %vm126, %v99, 0
    %v170 = vsel %vm126, %v100, 0
    %v173 = vsel %vm126, %v101, 0
    %v176 = vsel %vm126, %v102, 0
    %v179 = vsel %vm126, %v103, 0
    %v182 = vsel %vm126, %v104, 0
    %v185 = vsel %vm126, %v105, 0
    %v188 = vsel %vm126, %v106, 0
    %v191 = vsel %vm126, %v107, 0
    %v194 = vsel %vm126, %v108, 0
    %v197 = vsel %vm126, %v109, 0
    %v200 = vsel %vm126, %v110, 0
    %v203 = vsel %vm126, %v111, 0
    %v206 = vsel %vm126, %v112, 0
    %v209 = vsel %vm126, %v113, 0
    %v212 = vsel %vm126, %v114, 0
    %v215 = vsel %vm126, %v115, 0
    %v218 = vsel %vm126, %v116, 0
    %v221 = vsel %vm126, %v117, 0
    %vm223 = vcmask 1042432
    %vm224 = vcmask 1043456
    %v225 = vsel %vm223, 4294967295, 65535
    %v226 = vsel %vm224, %v225, 0
    %v228 = vand.u32 %v118, %v226
    %230 = vmatprep.subr.bf16.mxu0 0
    %231 = vmatpush1.bf16.msra.mxu0 0
    %232 = vmatprep.subr.bf16.mxu0 0
    %233 = vmatpush1.bf16.msra.mxu0 0
    %234 = vmatprep.subr.bf16.mxu0 0
    %235 = vmatpush1.bf16.msra.mxu0 0
    %236 = vmatprep.subr.bf16.mxu0 0
    %237 = vmatpush1.bf16.msra.mxu0 0
    %238 = vmatprep.subr.bf16.mxu0 0
    %239 = vmatpush1.bf16.msra.mxu0 0
    %240 = vmatprep.subr.bf16.mxu0 0
    %241 = vmatpush1.bf16.msra.mxu0 0
    %242 = vmatprep.subr.bf16.mxu0 0
    %243 = vmatpush1.bf16.msra.mxu0 0
    %244 = vmatprep.subr.bf16.mxu0 0
    %245 = vmatpush1.bf16.msra.mxu0 %v228
    %246 = vmatprep.subr.bf16.mxu0 0
    %247 = vmatpush2.bf16.msra.mxu0 0
    %248 = vmatprep.subr.bf16.mxu0 0
    %249 = vmatpush2.bf16.msra.mxu0 0
    %250 = vmatprep.subr.bf16.mxu0 0
    %251 = vmatpush2.bf16.msra.mxu0 0
    %252 = vmatprep.subr.bf16.mxu0 0
    %253 = vmatpush2.bf16.msra.mxu0 0
    %254 = vmatprep.subr.bf16.mxu0 0
    %255 = vmatpush2.bf16.msra.mxu0 0
    %256 = vmatprep.subr.bf16.mxu0 0
    %257 = vmatpush2.bf16.msra.mxu0 0
    %258 = vmatprep.subr.bf16.mxu0 0
    %259 = vmatpush2.bf16.msra.mxu0 0
    %260 = vmatprep.subr.bf16.mxu0 0
    %261 = vmatpush2.bf16.msra.mxu0 0
    %262 = vmatprep.mubr.bf16.mxu0 0
    %263 = vmatmul.mubr.bf16.gmra.mxu0 %v128
    %v264 = vpop.f32.mrf.mxu0
    %v265 = vadd.f32 %v124, %v264
    %v266 = vpop.f32.mrf.mxu0
    %v267 = vpop.f32.mrf.mxu0
    %v268 = vadd.f32 %v124, %v267
    %v269 = vpop.f32.mrf.mxu0
    %270 = vmatprep.mubr.bf16.mxu0 0
    %271 = vmatmul.mubr.bf16.gmra.mxu0 %v131
    %v272 = vpop.f32.mrf.mxu0
    %v273 = vadd.f32 %v124, %v272
    %v274 = vpop.f32.mrf.mxu0
    %v275 = vpop.f32.mrf.mxu0
    %v276 = vadd.f32 %v124, %v275
    %v277 = vpop.f32.mrf.mxu0
    %278 = vmatprep.mubr.bf16.mxu0 0
    %279 = vmatmul.mubr.bf16.gmra.mxu0 %v134
    %v280 = vpop.f32.mrf.mxu0
    %v281 = vadd.f32 %v124, %v280
    %v282 = vpop.f32.mrf.mxu0
    %v283 = vpop.f32.mrf.mxu0
    %v284 = vadd.f32 %v124, %v283
    %v285 = vpop.f32.mrf.mxu0
    %286 = vmatprep.mubr.bf16.mxu0 0
    %287 = vmatmul.mubr.bf16.gmra.mxu0 %v137
    %v288 = vpop.f32.mrf.mxu0
    %v289 = vadd.f32 %v124, %v288
    %v290 = vpop.f32.mrf.mxu0
    %v291 = vpop.f32.mrf.mxu0
    %v292 = vadd.f32 %v124, %v291
    %v293 = vpop.f32.mrf.mxu0
    %294 = vmatprep.mubr.bf16.mxu0 0
    %295 = vmatmul.mubr.bf16.gmra.mxu0 %v140
    %v296 = vpop.f32.mrf.mxu0
    %v297 = vadd.f32 %v124, %v296
    %v298 = vpop.f32.mrf.mxu0
    %v299 = vpop.f32.mrf.mxu0
    %v300 = vadd.f32 %v124, %v299
    %v301 = vpop.f32.mrf.mxu0
    %302 = vmatprep.mubr.bf16.mxu0 0
    %303 = vmatmul.mubr.bf16.gmra.mxu0 %v143
    %v304 = vpop.f32.mrf.mxu0
    %v305 = vadd.f32 %v124, %v304
    %v306 = vpop.f32.mrf.mxu0
    %v307 = vpop.f32.mrf.mxu0
    %v308 = vadd.f32 %v124, %v307
    %v309 = vpop.f32.mrf.mxu0
    %310 = vmatprep.mubr.bf16.mxu0 0
    %311 = vmatmul.mubr.bf16.gmra.mxu0 %v146
    %v312 = vpop.f32.mrf.mxu0
    %v313 = vadd.f32 %v124, %v312
    %v314 = vpop.f32.mrf.mxu0
    %v315 = vpop.f32.mrf.mxu0
    %v316 = vadd.f32 %v124, %v315
    %v317 = vpop.f32.mrf.mxu0
    %318 = vmatprep.mubr.bf16.mxu0 0
    %319 = vmatmul.mubr.bf16.gmra.mxu0 %v149
    %v320 = vpop.f32.mrf.mxu0
    %v321 = vadd.f32 %v124, %v320
    %v322 = vpop.f32.mrf.mxu0
    %v323 = vpop.f32.mrf.mxu0
    %v324 = vadd.f32 %v124, %v323
    %v325 = vpop.f32.mrf.mxu0
    %326 = vmatprep.mubr.bf16.mxu0 0
    %327 = vmatmul.mubr.bf16.gmra.mxu0 %v152
    %v328 = vpop.f32.mrf.mxu0
    %v329 = vadd.f32 %v124, %v328
    %v330 = vpop.f32.mrf.mxu0
    %v331 = vpop.f32.mrf.mxu0
    %v332 = vadd.f32 %v124, %v331
    %v333 = vpop.f32.mrf.mxu0
    %334 = vmatprep.mubr.bf16.mxu0 0
    %335 = vmatmul.mubr.bf16.gmra.mxu0 %v155
    %v336 = vpop.f32.mrf.mxu0
    %v337 = vadd.f32 %v124, %v336
    %v338 = vpop.f32.mrf.mxu0
    %v339 = vpop.f32.mrf.mxu0
    %v340 = vadd.f32 %v124, %v339
    %v341 = vpop.f32.mrf.mxu0
    %342 = vmatprep.mubr.bf16.mxu0 0
    %343 = vmatmul.mubr.bf16.gmra.mxu0 %v158
    %v344 = vpop.f32.mrf.mxu0
    %v345 = vadd.f32 %v124, %v344
    %v346 = vpop.f32.mrf.mxu0
    %v347 = vpop.f32.mrf.mxu0
    %v348 = vadd.f32 %v124, %v347
    %v349 = vpop.f32.mrf.mxu0
    %350 = vmatprep.mubr.bf16.mxu0 0
    %351 = vmatmul.mubr.bf16.gmra.mxu0 %v161
    %v352 = vpop.f32.mrf.mxu0
    %v353 = vadd.f32 %v124, %v352
    %v354 = vpop.f32.mrf.mxu0
    %v355 = vpop.f32.mrf.mxu0
    %v356 = vadd.f32 %v124, %v355
    %v357 = vpop.f32.mrf.mxu0
    %358 = vmatprep.mubr.bf16.mxu0 0
    %359 = vmatmul.mubr.bf16.gmra.mxu0 %v164
    %v360 = vpop.f32.mrf.mxu0
    %v361 = vadd.f32 %v124, %v360
    %v362 = vpop.f32.mrf.mxu0
    %v363 = vpop.f32.mrf.mxu0
    %v364 = vadd.f32 %v124, %v363
    %v365 = vpop.f32.mrf.mxu0
    %366 = vmatprep.mubr.bf16.mxu0 0
    %367 = vmatmul.mubr.bf16.gmra.mxu0 %v167
    %v368 = vpop.f32.mrf.mxu0
    %v369 = vadd.f32 %v124, %v368
    %v370 = vpop.f32.mrf.mxu0
    %v371 = vpop.f32.mrf.mxu0
    %v372 = vadd.f32 %v124, %v371
    %v373 = vpop.f32.mrf.mxu0
    %374 = vmatprep.mubr.bf16.mxu0 0
    %375 = vmatmul.mubr.bf16.gmra.mxu0 %v170
    %v376 = vpop.f32.mrf.mxu0
    %v377 = vadd.f32 %v124, %v376
    %v378 = vpop.f32.mrf.mxu0
    %v379 = vpop.f32.mrf.mxu0
    %v380 = vadd.f32 %v124, %v379
    %v381 = vpop.f32.mrf.mxu0
    %382 = vmatprep.mubr.bf16.mxu0 0
    %383 = vmatmul.mubr.bf16.gmra.mxu0 %v173
    %v384 = vpop.f32.mrf.mxu0
    %v385 = vadd.f32 %v124, %v384
    %v386 = vpop.f32.mrf.mxu0
    %v387 = vpop.f32.mrf.mxu0
    %v388 = vadd.f32 %v124, %v387
    %v389 = vpop.f32.mrf.mxu0
    %390 = vmatprep.mubr.bf16.mxu0 0
    %391 = vmatmul.mubr.bf16.gmra.mxu0 %v176
    %v392 = vpop.f32.mrf.mxu0
    %v393 = vadd.f32 %v124, %v392
    %v394 = vpop.f32.mrf.mxu0
    %v395 = vpop.f32.mrf.mxu0
    %v396 = vadd.f32 %v124, %v395
    %v397 = vpop.f32.mrf.mxu0
    %398 = vmatprep.mubr.bf16.mxu0 0
    %399 = vmatmul.mubr.bf16.gmra.mxu0 %v179
    %v400 = vpop.f32.mrf.mxu0
    %v401 = vadd.f32 %v124, %v400
    %v402 = vpop.f32.mrf.mxu0
    %v403 = vpop.f32.mrf.mxu0
    %v404 = vadd.f32 %v124, %v403
    %v405 = vpop.f32.mrf.mxu0
    %406 = vmatprep.mubr.bf16.mxu0 0
    %407 = vmatmul.mubr.bf16.gmra.mxu0 %v182
    %v408 = vpop.f32.mrf.mxu0
    %v409 = vadd.f32 %v124, %v408
    %v410 = vpop.f32.mrf.mxu0
    %v411 = vpop.f32.mrf.mxu0
    %v412 = vadd.f32 %v124, %v411
    %v413 = vpop.f32.mrf.mxu0
    %414 = vmatprep.mubr.bf16.mxu0 0
    %415 = vmatmul.mubr.bf16.gmra.mxu0 %v185
    %v416 = vpop.f32.mrf.mxu0
    %v417 = vadd.f32 %v124, %v416
    %v418 = vpop.f32.mrf.mxu0
    %v419 = vpop.f32.mrf.mxu0
    %v420 = vadd.f32 %v124, %v419
    %v421 = vpop.f32.mrf.mxu0
    %422 = vmatprep.mubr.bf16.mxu0 0
    %423 = vmatmul.mubr.bf16.gmra.mxu0 %v188
    %v424 = vpop.f32.mrf.mxu0
    %v425 = vadd.f32 %v124, %v424
    %v426 = vpop.f32.mrf.mxu0
    %v427 = vpop.f32.mrf.mxu0
    %v428 = vadd.f32 %v124, %v427
    %v429 = vpop.f32.mrf.mxu0
    %430 = vmatprep.mubr.bf16.mxu0 0
    %431 = vmatmul.mubr.bf16.gmra.mxu0 %v191
    %v432 = vpop.f32.mrf.mxu0
    %v433 = vadd.f32 %v124, %v432
    %v434 = vpop.f32.mrf.mxu0
    %v435 = vpop.f32.mrf.mxu0
    %v436 = vadd.f32 %v124, %v435
    %v437 = vpop.f32.mrf.mxu0
    %438 = vmatprep.mubr.bf16.mxu0 0
    %439 = vmatmul.mubr.bf16.gmra.mxu0 %v194
    %v440 = vpop.f32.mrf.mxu0
    %v441 = vadd.f32 %v124, %v440
    %v442 = vpop.f32.mrf.mxu0
    %v443 = vpop.f32.mrf.mxu0
    %v444 = vadd.f32 %v124, %v443
    %v445 = vpop.f32.mrf.mxu0
    %446 = vmatprep.mubr.bf16.mxu0 0
    %447 = vmatmul.mubr.bf16.gmra.mxu0 %v197
    %v448 = vpop.f32.mrf.mxu0
    %v449 = vadd.f32 %v124, %v448
    %v450 = vpop.f32.mrf.mxu0
    %v451 = vpop.f32.mrf.mxu0
    %v452 = vadd.f32 %v124, %v451
    %v453 = vpop.f32.mrf.mxu0
    %454 = vmatprep.mubr.bf16.mxu0 0
    %455 = vmatmul.mubr.bf16.gmra.mxu0 %v200
    %v456 = vpop.f32.mrf.mxu0
    %v457 = vadd.f32 %v124, %v456
    %v458 = vpop.f32.mrf.mxu0
    %v459 = vpop.f32.mrf.mxu0
    %v460 = vadd.f32 %v124, %v459
    %v461 = vpop.f32.mrf.mxu0
    %462 = vmatprep.mubr.bf16.mxu0 0
    %463 = vmatmul.mubr.bf16.gmra.mxu0 %v203
    %v464 = vpop.f32.mrf.mxu0
    %v465 = vadd.f32 %v124, %v464
    %v466 = vpop.f32.mrf.mxu0
    %v467 = vpop.f32.mrf.mxu0
    %v468 = vadd.f32 %v124, %v467
    %v469 = vpop.f32.mrf.mxu0
    %470 = vmatprep.mubr.bf16.mxu0 0
    %471 = vmatmul.mubr.bf16.gmra.mxu0 %v206
    %v472 = vpop.f32.mrf.mxu0
    %v473 = vadd.f32 %v124, %v472
    %v474 = vpop.f32.mrf.mxu0
    %v475 = vpop.f32.mrf.mxu0
    %v476 = vadd.f32 %v124, %v475
    %v477 = vpop.f32.mrf.mxu0
    %478 = vmatprep.mubr.bf16.mxu0 0
    %479 = vmatmul.mubr.bf16.gmra.mxu0 %v209
    %v480 = vpop.f32.mrf.mxu0
    %v481 = vadd.f32 %v124, %v480
    %v482 = vpop.f32.mrf.mxu0
    %v483 = vpop.f32.mrf.mxu0
    %v484 = vadd.f32 %v124, %v483
    %v485 = vpop.f32.mrf.mxu0
    %486 = vmatprep.mubr.bf16.mxu0 0
    %487 = vmatmul.mubr.bf16.gmra.mxu0 %v212
    %v488 = vpop.f32.mrf.mxu0
    %v489 = vadd.f32 %v124, %v488
    %v490 = vpop.f32.mrf.mxu0
    %v491 = vpop.f32.mrf.mxu0
    %v492 = vadd.f32 %v124, %v491
    %v493 = vpop.f32.mrf.mxu0
    %494 = vmatprep.mubr.bf16.mxu0 0
    %495 = vmatmul.mubr.bf16.gmra.mxu0 %v215
    %v496 = vpop.f32.mrf.mxu0
    %v497 = vadd.f32 %v124, %v496
    %v498 = vpop.f32.mrf.mxu0
    %v499 = vpop.f32.mrf.mxu0
    %v500 = vadd.f32 %v124, %v499
    %v501 = vpop.f32.mrf.mxu0
    %502 = vmatprep.mubr.bf16.mxu0 0
    %503 = vmatmul.mubr.bf16.gmra.mxu0 %v218
    %v504 = vpop.f32.mrf.mxu0
    %v505 = vadd.f32 %v124, %v504
    %v506 = vpop.f32.mrf.mxu0
    %v507 = vpop.f32.mrf.mxu0
    %v508 = vadd.f32 %v124, %v507
    %v509 = vpop.f32.mrf.mxu0
    %510 = vmatprep.mubr.bf16.mxu0 0
    %511 = vmatmul.mubr.bf16.gmra.mxu0 %v221
    %v512 = vpop.f32.mrf.mxu0
    %v513 = vadd.f32 %v124, %v512
    %v514 = vpop.f32.mrf.mxu0
    %v515 = vpop.f32.mrf.mxu0
    %v516 = vadd.f32 %v124, %v515
    %v517 = vpop.f32.mrf.mxu0
    %518 = vdwg.mxu0
    %v519 = vmax.f32 %v265, 0.0
    %v520 = vmax.f32 %v268, 0.0
    %v521 = vmax.f32 %v273, 0.0
    %v522 = vmax.f32 %v276, 0.0
    %v523 = vmax.f32 %v281, 0.0
    %v524 = vmax.f32 %v284, 0.0
    %v525 = vmax.f32 %v289, 0.0
    %v526 = vmax.f32 %v292, 0.0
    %v527 = vmax.f32 %v297, 0.0
    %v528 = vmax.f32 %v300, 0.0
    %v529 = vmax.f32 %v305, 0.0
    %v530 = vmax.f32 %v308, 0.0
    %v531 = vmax.f32 %v313, 0.0
    %v532 = vmax.f32 %v316, 0.0
    %v533 = vmax.f32 %v321, 0.0
    %v534 = vmax.f32 %v324, 0.0
    %v535 = vmax.f32 %v329, 0.0
    %v536 = vmax.f32 %v332, 0.0
    %v537 = vmax.f32 %v337, 0.0
    %v538 = vmax.f32 %v340, 0.0
    %v539 = vmax.f32 %v345, 0.0
    %v540 = vmax.f32 %v348, 0.0
    %v541 = vmax.f32 %v353, 0.0
    %v542 = vmax.f32 %v356, 0.0
    %v543 = vmax.f32 %v361, 0.0
    %v544 = vmax.f32 %v364, 0.0
    %v545 = vmax.f32 %v369, 0.0
    %v546 = vmax.f32 %v372, 0.0
    %v547 = vmax.f32 %v377, 0.0
    %v548 = vmax.f32 %v380, 0.0
    %v549 = vmax.f32 %v385, 0.0
    %v550 = vmax.f32 %v388, 0.0
    %v551 = vmax.f32 %v393, 0.0
    %v552 = vmax.f32 %v396, 0.0
    %v553 = vmax.f32 %v401, 0.0
    %v554 = vmax.f32 %v404, 0.0
    %v555 = vmax.f32 %v409, 0.0
    %v556 = vmax.f32 %v412, 0.0
    %v557 = vmax.f32 %v417, 0.0
    %v558 = vmax.f32 %v420, 0.0
    %v559 = vmax.f32 %v425, 0.0
    %v560 = vmax.f32 %v428, 0.0
    %v561 = vmax.f32 %v433, 0.0
    %v562 = vmax.f32 %v436, 0.0
    %v563 = vmax.f32 %v441, 0.0
    %v564 = vmax.f32 %v444, 0.0
    %v565 = vmax.f32 %v449, 0.0
    %v566 = vmax.f32 %v452, 0.0
    %v567 = vmax.f32 %v457, 0.0
    %v568 = vmax.f32 %v460, 0.0
    %v569 = vmax.f32 %v465, 0.0
    %v570 = vmax.f32 %v468, 0.0
    %v571 = vmax.f32 %v473, 0.0
    %v572 = vmax.f32 %v476, 0.0
    %v573 = vmax.f32 %v481, 0.0
    %v574 = vmax.f32 %v484, 0.0
    %v575 = vmax.f32 %v489, 0.0
    %v576 = vmax.f32 %v492, 0.0
    %v577 = vmax.f32 %v497, 0.0
    %v578 = vmax.f32 %v500, 0.0
    %v579 = vmax.f32 %v505, 0.0
    %v580 = vmax.f32 %v508, 0.0
    %v581 = vmax.f32 %v513, 0.0
    %v582 = vmax.f32 %v516, 0.0
    %v583 = vpack.c.bf16 %v520, %v519
    %v584 = vpack.c.bf16 %v522, %v521
    %v585 = vpack.c.bf16 %v524, %v523
    %v586 = vpack.c.bf16 %v526, %v525
    %v587 = vpack.c.bf16 %v528, %v527
    %v588 = vpack.c.bf16 %v530, %v529
    %v589 = vpack.c.bf16 %v532, %v531
    %v590 = vpack.c.bf16 %v534, %v533
    %v591 = vpack.c.bf16 %v536, %v535
    %v592 = vpack.c.bf16 %v538, %v537
    %v593 = vpack.c.bf16 %v540, %v539
    %v594 = vpack.c.bf16 %v542, %v541
    %v595 = vpack.c.bf16 %v544, %v543
    %v596 = vpack.c.bf16 %v546, %v545
    %v597 = vpack.c.bf16 %v548, %v547
    %v598 = vpack.c.bf16 %v550, %v549
    %v599 = vpack.c.bf16 %v552, %v551
    %v600 = vpack.c.bf16 %v554, %v553
    %v601 = vpack.c.bf16 %v556, %v555
    %v602 = vpack.c.bf16 %v558, %v557
    %v603 = vpack.c.bf16 %v560, %v559
    %v604 = vpack.c.bf16 %v562, %v561
    %v605 = vpack.c.bf16 %v564, %v563
    %v606 = vpack.c.bf16 %v566, %v565
    %v607 = vpack.c.bf16 %v568, %v567
    %v608 = vpack.c.bf16 %v570, %v569
    %v609 = vpack.c.bf16 %v572, %v571
    %v610 = vpack.c.bf16 %v574, %v573
    %v611 = vpack.c.bf16 %v576, %v575
    %v612 = vpack.c.bf16 %v578, %v577
    %v613 = vpack.c.bf16 %v580, %v579
    %v614 = vpack.c.bf16 %v582, %v581
    %v615 = vld [vmem:[%s3] sm:$0xf]
    %v616 = vld [vmem:[%s3 + $0x4] sm:$0xf]
    %v617 = vld [vmem:[%s3 + $0x8] sm:$0xf]
    %v618 = vld [vmem:[%s3 + $0xc] sm:$0xf]
    %v619 = vld [vmem:[%s3 + $0x10] sm:$0xf]
    %v620 = vld [vmem:[%s3 + $0x14] sm:$0xf]
    %v621 = vld [vmem:[%s3 + $0x18] sm:$0xf]
    %v622 = vld [vmem:[%s3 + $0x1c] sm:$0xf]
    %v623 = vld [vmem:[%s3 + $0x20] sm:$0xf]
    %v624 = vld [vmem:[%s3 + $0x24] sm:$0xf]
    %v625 = vld [vmem:[%s3 + $0x28] sm:$0xf]
    %v626 = vld [vmem:[%s3 + $0x2c] sm:$0xf]
    %v627 = vld [vmem:[%s3 + $0x30] sm:$0xf]
    %v628 = vld [vmem:[%s3 + $0x34] sm:$0xf]
    %v629 = vld [vmem:[%s3 + $0x38] sm:$0xf]
    %v630 = vld [vmem:[%s3 + $0x3c] sm:$0xf]
    %v647 = vunpack.c.l.b16 %v615
    %v648 = vunpack.c.l.b16 %v616
    %v649 = vunpack.c.l.b16 %v617
    %v650 = vunpack.c.l.b16 %v618
    %v651 = vunpack.c.l.b16 %v619
    %v652 = vunpack.c.l.b16 %v620
    %v653 = vunpack.c.l.b16 %v621
    %v654 = vunpack.c.l.b16 %v622
    %v655 = vunpack.c.l.b16 %v623
    %v656 = vunpack.c.l.b16 %v624
    %v657 = vunpack.c.l.b16 %v625
    %v658 = vunpack.c.l.b16 %v626
    %v659 = vunpack.c.l.b16 %v627
    %v660 = vunpack.c.l.b16 %v628
    %v661 = vunpack.c.l.b16 %v629
    %v662 = vunpack.c.l.b16 %v630
    %v663 = vpack.c.b16 %v648, %v647
    %v664 = vpack.c.b16 %v650, %v649
    %v665 = vpack.c.b16 %v652, %v651
    %v666 = vpack.c.b16 %v654, %v653
    %v667 = vpack.c.b16 %v656, %v655
    %v668 = vpack.c.b16 %v658, %v657
    %v669 = vpack.c.b16 %v660, %v659
    %v670 = vpack.c.b16 %v662, %v661
    %679 = vmatprep.subr.bf16.mxu0 0
    %680 = vmatpush1.bf16.msra.mxu0 %v670
    %681 = vmatprep.subr.bf16.mxu0 0
    %682 = vmatpush1.bf16.msra.mxu0 %v669
    %683 = vmatprep.subr.bf16.mxu0 0
    %684 = vmatpush1.bf16.msra.mxu0 %v668
    %685 = vmatprep.subr.bf16.mxu0 0
    %686 = vmatpush1.bf16.msra.mxu0 %v667
    %687 = vmatprep.subr.bf16.mxu0 0
    %688 = vmatpush1.bf16.msra.mxu0 %v666
    %689 = vmatprep.subr.bf16.mxu0 0
    %690 = vmatpush1.bf16.msra.mxu0 %v665
    %691 = vmatprep.subr.bf16.mxu0 0
    %692 = vmatpush1.bf16.msra.mxu0 %v664
    %693 = vmatprep.subr.bf16.mxu0 0
    %694 = vmatpush1.bf16.msra.mxu0 %v663
    %695 = vmatprep.subr.bf16.mxu0 0
    %696 = vmatpush2.bf16.msra.mxu0 0
    %697 = vmatprep.subr.bf16.mxu0 0
    %698 = vmatpush2.bf16.msra.mxu0 0
    %699 = vmatprep.subr.bf16.mxu0 0
    %700 = vmatpush2.bf16.msra.mxu0 0
    %701 = vmatprep.subr.bf16.mxu0 0
    %702 = vmatpush2.bf16.msra.mxu0 0
    %703 = vmatprep.subr.bf16.mxu0 0
    %704 = vmatpush2.bf16.msra.mxu0 0
    %705 = vmatprep.subr.bf16.mxu0 0
    %706 = vmatpush2.bf16.msra.mxu0 0
    %707 = vmatprep.subr.bf16.mxu0 0
    %708 = vmatpush2.bf16.msra.mxu0 0
    %709 = vmatprep.subr.bf16.mxu0 0
    %710 = vmatpush2.bf16.msra.mxu0 0
    %711 = vmatprep.mubr.bf16.mxu0 0
    %712 = vmatmul.mubr.bf16.gmra.mxu0 %v583
    %v713 = vpop.f32.mrf.mxu0
    %v714 = vadd.f32 0.0, %v713
    %v715 = vpop.f32.mrf.mxu0
    %v716 = vpop.f32.mrf.mxu0
    %v717 = vadd.f32 0.0, %v716
    %v718 = vpop.f32.mrf.mxu0
    %719 = vmatprep.mubr.bf16.mxu0 0
    %720 = vmatmul.mubr.bf16.gmra.mxu0 %v584
    %v721 = vpop.f32.mrf.mxu0
    %v722 = vadd.f32 0.0, %v721
    %v723 = vpop.f32.mrf.mxu0
    %v724 = vpop.f32.mrf.mxu0
    %v725 = vadd.f32 0.0, %v724
    %v726 = vpop.f32.mrf.mxu0
    %727 = vmatprep.mubr.bf16.mxu0 0
    %728 = vmatmul.mubr.bf16.gmra.mxu0 %v585
    %v729 = vpop.f32.mrf.mxu0
    %v730 = vadd.f32 0.0, %v729
    %v731 = vpop.f32.mrf.mxu0
    %v732 = vpop.f32.mrf.mxu0
    %v733 = vadd.f32 0.0, %v732
    %v734 = vpop.f32.mrf.mxu0
    %735 = vmatprep.mubr.bf16.mxu0 0
    %736 = vmatmul.mubr.bf16.gmra.mxu0 %v586
    %v737 = vpop.f32.mrf.mxu0
    %v738 = vadd.f32 0.0, %v737
    %v739 = vpop.f32.mrf.mxu0
    %v740 = vpop.f32.mrf.mxu0
    %v741 = vadd.f32 0.0, %v740
    %v742 = vpop.f32.mrf.mxu0
    %743 = vmatprep.mubr.bf16.mxu0 0
    %744 = vmatmul.mubr.bf16.gmra.mxu0 %v587
    %v745 = vpop.f32.mrf.mxu0
    %v746 = vadd.f32 0.0, %v745
    %v747 = vpop.f32.mrf.mxu0
    %v748 = vpop.f32.mrf.mxu0
    %v749 = vadd.f32 0.0, %v748
    %v750 = vpop.f32.mrf.mxu0
    %751 = vmatprep.mubr.bf16.mxu0 0
    %752 = vmatmul.mubr.bf16.gmra.mxu0 %v588
    %v753 = vpop.f32.mrf.mxu0
    %v754 = vadd.f32 0.0, %v753
    %v755 = vpop.f32.mrf.mxu0
    %v756 = vpop.f32.mrf.mxu0
    %v757 = vadd.f32 0.0, %v756
    %v758 = vpop.f32.mrf.mxu0
    %759 = vmatprep.mubr.bf16.mxu0 0
    %760 = vmatmul.mubr.bf16.gmra.mxu0 %v589
    %v761 = vpop.f32.mrf.mxu0
    %v762 = vadd.f32 0.0, %v761
    %v763 = vpop.f32.mrf.mxu0
    %v764 = vpop.f32.mrf.mxu0
    %v765 = vadd.f32 0.0, %v764
    %v766 = vpop.f32.mrf.mxu0
    %767 = vmatprep.mubr.bf16.mxu0 0
    %768 = vmatmul.mubr.bf16.gmra.mxu0 %v590
    %v769 = vpop.f32.mrf.mxu0
    %v770 = vadd.f32 0.0, %v769
    %v771 = vpop.f32.mrf.mxu0
    %v772 = vpop.f32.mrf.mxu0
    %v773 = vadd.f32 0.0, %v772
    %v774 = vpop.f32.mrf.mxu0
    %775 = vmatprep.mubr.bf16.mxu0 0
    %776 = vmatmul.mubr.bf16.gmra.mxu0 %v591
    %v777 = vpop.f32.mrf.mxu0
    %v778 = vadd.f32 0.0, %v777
    %v779 = vpop.f32.mrf.mxu0
    %v780 = vpop.f32.mrf.mxu0
    %v781 = vadd.f32 0.0, %v780
    %v782 = vpop.f32.mrf.mxu0
    %783 = vmatprep.mubr.bf16.mxu0 0
    %784 = vmatmul.mubr.bf16.gmra.mxu0 %v592
    %v785 = vpop.f32.mrf.mxu0
    %v786 = vadd.f32 0.0, %v785
    %v787 = vpop.f32.mrf.mxu0
    %v788 = vpop.f32.mrf.mxu0
    %v789 = vadd.f32 0.0, %v788
    %v790 = vpop.f32.mrf.mxu0
    %791 = vmatprep.mubr.bf16.mxu0 0
    %792 = vmatmul.mubr.bf16.gmra.mxu0 %v593
    %v793 = vpop.f32.mrf.mxu0
    %v794 = vadd.f32 0.0, %v793
    %v795 = vpop.f32.mrf.mxu0
    %v796 = vpop.f32.mrf.mxu0
    %v797 = vadd.f32 0.0, %v796
    %v798 = vpop.f32.mrf.mxu0
    %799 = vmatprep.mubr.bf16.mxu0 0
    %800 = vmatmul.mubr.bf16.gmra.mxu0 %v594
    %v801 = vpop.f32.mrf.mxu0
    %v802 = vadd.f32 0.0, %v801
    %v803 = vpop.f32.mrf.mxu0
    %v804 = vpop.f32.mrf.mxu0
    %v805 = vadd.f32 0.0, %v804
    %v806 = vpop.f32.mrf.mxu0
    %807 = vmatprep.mubr.bf16.mxu0 0
    %808 = vmatmul.mubr.bf16.gmra.mxu0 %v595
    %v809 = vpop.f32.mrf.mxu0
    %v810 = vadd.f32 0.0, %v809
    %v811 = vpop.f32.mrf.mxu0
    %v812 = vpop.f32.mrf.mxu0
    %v813 = vadd.f32 0.0, %v812
    %v814 = vpop.f32.mrf.mxu0
    %815 = vmatprep.mubr.bf16.mxu0 0
    %816 = vmatmul.mubr.bf16.gmra.mxu0 %v596
    %v817 = vpop.f32.mrf.mxu0
    %v818 = vadd.f32 0.0, %v817
    %v819 = vpop.f32.mrf.mxu0
    %v820 = vpop.f32.mrf.mxu0
    %v821 = vadd.f32 0.0, %v820
    %v822 = vpop.f32.mrf.mxu0
    %823 = vmatprep.mubr.bf16.mxu0 0
    %824 = vmatmul.mubr.bf16.gmra.mxu0 %v597
    %v825 = vpop.f32.mrf.mxu0
    %v826 = vadd.f32 0.0, %v825
    %v827 = vpop.f32.mrf.mxu0
    %v828 = vpop.f32.mrf.mxu0
    %v829 = vadd.f32 0.0, %v828
    %v830 = vpop.f32.mrf.mxu0
    %831 = vmatprep.mubr.bf16.mxu0 0
    %832 = vmatmul.mubr.bf16.gmra.mxu0 %v598
    %v833 = vpop.f32.mrf.mxu0
    %v834 = vadd.f32 0.0, %v833
    %v835 = vpop.f32.mrf.mxu0
    %v836 = vpop.f32.mrf.mxu0
    %v837 = vadd.f32 0.0, %v836
    %v838 = vpop.f32.mrf.mxu0
    %839 = vmatprep.mubr.bf16.mxu0 0
    %840 = vmatmul.mubr.bf16.gmra.mxu0 %v599
    %v841 = vpop.f32.mrf.mxu0
    %v842 = vadd.f32 0.0, %v841
    %v843 = vpop.f32.mrf.mxu0
    %v844 = vpop.f32.mrf.mxu0
    %v845 = vadd.f32 0.0, %v844
    %v846 = vpop.f32.mrf.mxu0
    %847 = vmatprep.mubr.bf16.mxu0 0
    %848 = vmatmul.mubr.bf16.gmra.mxu0 %v600
    %v849 = vpop.f32.mrf.mxu0
    %v850 = vadd.f32 0.0, %v849
    %v851 = vpop.f32.mrf.mxu0
    %v852 = vpop.f32.mrf.mxu0
    %v853 = vadd.f32 0.0, %v852
    %v854 = vpop.f32.mrf.mxu0
    %855 = vmatprep.mubr.bf16.mxu0 0
    %856 = vmatmul.mubr.bf16.gmra.mxu0 %v601
    %v857 = vpop.f32.mrf.mxu0
    %v858 = vadd.f32 0.0, %v857
    %v859 = vpop.f32.mrf.mxu0
    %v860 = vpop.f32.mrf.mxu0
    %v861 = vadd.f32 0.0, %v860
    %v862 = vpop.f32.mrf.mxu0
    %863 = vmatprep.mubr.bf16.mxu0 0
    %864 = vmatmul.mubr.bf16.gmra.mxu0 %v602
    %v865 = vpop.f32.mrf.mxu0
    %v866 = vadd.f32 0.0, %v865
    %v867 = vpop.f32.mrf.mxu0
    %v868 = vpop.f32.mrf.mxu0
    %v869 = vadd.f32 0.0, %v868
    %v870 = vpop.f32.mrf.mxu0
    %871 = vmatprep.mubr.bf16.mxu0 0
    %872 = vmatmul.mubr.bf16.gmra.mxu0 %v603
    %v873 = vpop.f32.mrf.mxu0
    %v874 = vadd.f32 0.0, %v873
    %v875 = vpop.f32.mrf.mxu0
    %v876 = vpop.f32.mrf.mxu0
    %v877 = vadd.f32 0.0, %v876
    %v878 = vpop.f32.mrf.mxu0
    %879 = vmatprep.mubr.bf16.mxu0 0
    %880 = vmatmul.mubr.bf16.gmra.mxu0 %v604
    %v881 = vpop.f32.mrf.mxu0
    %v882 = vadd.f32 0.0, %v881
    %v883 = vpop.f32.mrf.mxu0
    %v884 = vpop.f32.mrf.mxu0
    %v885 = vadd.f32 0.0, %v884
    %v886 = vpop.f32.mrf.mxu0
    %887 = vmatprep.mubr.bf16.mxu0 0
    %888 = vmatmul.mubr.bf16.gmra.mxu0 %v605
    %v889 = vpop.f32.mrf.mxu0
    %v890 = vadd.f32 0.0, %v889
    %v891 = vpop.f32.mrf.mxu0
    %v892 = vpop.f32.mrf.mxu0
    %v893 = vadd.f32 0.0, %v892
    %v894 = vpop.f32.mrf.mxu0
    %895 = vmatprep.mubr.bf16.mxu0 0
    %896 = vmatmul.mubr.bf16.gmra.mxu0 %v606
    %v897 = vpop.f32.mrf.mxu0
    %v898 = vadd.f32 0.0, %v897
    %v899 = vpop.f32.mrf.mxu0
    %v900 = vpop.f32.mrf.mxu0
    %v901 = vadd.f32 0.0, %v900
    %v902 = vpop.f32.mrf.mxu0
    %903 = vmatprep.mubr.bf16.mxu0 0
    %904 = vmatmul.mubr.bf16.gmra.mxu0 %v607
    %v905 = vpop.f32.mrf.mxu0
    %v906 = vadd.f32 0.0, %v905
    %v907 = vpop.f32.mrf.mxu0
    %v908 = vpop.f32.mrf.mxu0
    %v909 = vadd.f32 0.0, %v908
    %v910 = vpop.f32.mrf.mxu0
    %911 = vmatprep.mubr.bf16.mxu0 0
    %912 = vmatmul.mubr.bf16.gmra.mxu0 %v608
    %v913 = vpop.f32.mrf.mxu0
    %v914 = vadd.f32 0.0, %v913
    %v915 = vpop.f32.mrf.mxu0
    %v916 = vpop.f32.mrf.mxu0
    %v917 = vadd.f32 0.0, %v916
    %v918 = vpop.f32.mrf.mxu0
    %919 = vmatprep.mubr.bf16.mxu0 0
    %920 = vmatmul.mubr.bf16.gmra.mxu0 %v609
    %v921 = vpop.f32.mrf.mxu0
    %v922 = vadd.f32 0.0, %v921
    %v923 = vpop.f32.mrf.mxu0
    %v924 = vpop.f32.mrf.mxu0
    %v925 = vadd.f32 0.0, %v924
    %v926 = vpop.f32.mrf.mxu0
    %927 = vmatprep.mubr.bf16.mxu0 0
    %928 = vmatmul.mubr.bf16.gmra.mxu0 %v610
    %v929 = vpop.f32.mrf.mxu0
    %v930 = vadd.f32 0.0, %v929
    %v931 = vpop.f32.mrf.mxu0
    %v932 = vpop.f32.mrf.mxu0
    %v933 = vadd.f32 0.0, %v932
    %v934 = vpop.f32.mrf.mxu0
    %935 = vmatprep.mubr.bf16.mxu0 0
    %936 = vmatmul.mubr.bf16.gmra.mxu0 %v611
    %v937 = vpop.f32.mrf.mxu0
    %v938 = vadd.f32 0.0, %v937
    %v939 = vpop.f32.mrf.mxu0
    %v940 = vpop.f32.mrf.mxu0
    %v941 = vadd.f32 0.0, %v940
    %v942 = vpop.f32.mrf.mxu0
    %943 = vmatprep.mubr.bf16.mxu0 0
    %944 = vmatmul.mubr.bf16.gmra.mxu0 %v612
    %v945 = vpop.f32.mrf.mxu0
    %v946 = vadd.f32 0.0, %v945
    %v947 = vpop.f32.mrf.mxu0
    %v948 = vpop.f32.mrf.mxu0
    %v949 = vadd.f32 0.0, %v948
    %v950 = vpop.f32.mrf.mxu0
    %951 = vmatprep.mubr.bf16.mxu0 0
    %952 = vmatmul.mubr.bf16.gmra.mxu0 %v613
    %v953 = vpop.f32.mrf.mxu0
    %v954 = vadd.f32 0.0, %v953
    %v955 = vpop.f32.mrf.mxu0
    %v956 = vpop.f32.mrf.mxu0
    %v957 = vadd.f32 0.0, %v956
    %v958 = vpop.f32.mrf.mxu0
    %959 = vmatprep.mubr.bf16.mxu0 0
    %960 = vmatmul.mubr.bf16.gmra.mxu0 %v614
    %v961 = vpop.f32.mrf.mxu0
    %v962 = vadd.f32 0.0, %v961
    %v963 = vpop.f32.mrf.mxu0
    %v964 = vpop.f32.mrf.mxu0
    %v965 = vadd.f32 0.0, %v964
    %v966 = vpop.f32.mrf.mxu0
    %967 = vdwg.mxu0
    %v968 = vmax.f32 %v714, %v717
    %v969 = vrot.slane %v968, 4
    %v970 = vmax.f32 %v968, %v969
    %v971 = vrot.slane %v970, 2
    %v972 = vmax.f32 %v970, %v971
    %v973 = vrot.slane %v972, 1
    %v974 = vmax.f32 %v972, %v973
    %v975 = vmax.f32 %v722, %v725
    %v976 = vrot.slane %v975, 4
    %v977 = vmax.f32 %v975, %v976
    %v978 = vrot.slane %v977, 2
    %v979 = vmax.f32 %v977, %v978
    %v980 = vrot.slane %v979, 1
    %v981 = vmax.f32 %v979, %v980
    %v982 = vmax.f32 %v730, %v733
    %v983 = vrot.slane %v982, 4
    %v984 = vmax.f32 %v982, %v983
    %v985 = vrot.slane %v984, 2
    %v986 = vmax.f32 %v984, %v985
    %v987 = vrot.slane %v986, 1
    %v988 = vmax.f32 %v986, %v987
    %v989 = vmax.f32 %v738, %v741
    %v990 = vrot.slane %v989, 4
    %v991 = vmax.f32 %v989, %v990
    %v992 = vrot.slane %v991, 2
    %v993 = vmax.f32 %v991, %v992
    %v994 = vrot.slane %v993, 1
    %v995 = vmax.f32 %v993, %v994
    %v996 = vmax.f32 %v746, %v749
    %v997 = vrot.slane %v996, 4
    %v998 = vmax.f32 %v996, %v997
    %v999 = vrot.slane %v998, 2
    %v1000 = vmax.f32 %v998, %v999
    %v1001 = vrot.slane %v1000, 1
    %v1002 = vmax.f32 %v1000, %v1001
    %v1003 = vmax.f32 %v754, %v757
    %v1004 = vrot.slane %v1003, 4
    %v1005 = vmax.f32 %v1003, %v1004
    %v1006 = vrot.slane %v1005, 2
    %v1007 = vmax.f32 %v1005, %v1006
    %v1008 = vrot.slane %v1007, 1
    %v1009 = vmax.f32 %v1007, %v1008
    %v1010 = vmax.f32 %v762, %v765
    %v1011 = vrot.slane %v1010, 4
    %v1012 = vmax.f32 %v1010, %v1011
    %v1013 = vrot.slane %v1012, 2
    %v1014 = vmax.f32 %v1012, %v1013
    %v1015 = vrot.slane %v1014, 1
    %v1016 = vmax.f32 %v1014, %v1015
    %v1017 = vmax.f32 %v770, %v773
    %v1018 = vrot.slane %v1017, 4
    %v1019 = vmax.f32 %v1017, %v1018
    %v1020 = vrot.slane %v1019, 2
    %v1021 = vmax.f32 %v1019, %v1020
    %v1022 = vrot.slane %v1021, 1
    %v1023 = vmax.f32 %v1021, %v1022
    %v1024 = vmax.f32 %v778, %v781
    %v1025 = vrot.slane %v1024, 4
    %v1026 = vmax.f32 %v1024, %v1025
    %v1027 = vrot.slane %v1026, 2
    %v1028 = vmax.f32 %v1026, %v1027
    %v1029 = vrot.slane %v1028, 1
    %v1030 = vmax.f32 %v1028, %v1029
    %v1031 = vmax.f32 %v786, %v789
    %v1032 = vrot.slane %v1031, 4
    %v1033 = vmax.f32 %v1031, %v1032
    %v1034 = vrot.slane %v1033, 2
    %v1035 = vmax.f32 %v1033, %v1034
    %v1036 = vrot.slane %v1035, 1
    %v1037 = vmax.f32 %v1035, %v1036
    %v1038 = vmax.f32 %v794, %v797
    %v1039 = vrot.slane %v1038, 4
    %v1040 = vmax.f32 %v1038, %v1039
    %v1041 = vrot.slane %v1040, 2
    %v1042 = vmax.f32 %v1040, %v1041
    %v1043 = vrot.slane %v1042, 1
    %v1044 = vmax.f32 %v1042, %v1043
    %v1045 = vmax.f32 %v802, %v805
    %v1046 = vrot.slane %v1045, 4
    %v1047 = vmax.f32 %v1045, %v1046
    %v1048 = vrot.slane %v1047, 2
    %v1049 = vmax.f32 %v1047, %v1048
    %v1050 = vrot.slane %v1049, 1
    %v1051 = vmax.f32 %v1049, %v1050
    %v1052 = vmax.f32 %v810, %v813
    %v1053 = vrot.slane %v1052, 4
    %v1054 = vmax.f32 %v1052, %v1053
    %v1055 = vrot.slane %v1054, 2
    %v1056 = vmax.f32 %v1054, %v1055
    %v1057 = vrot.slane %v1056, 1
    %v1058 = vmax.f32 %v1056, %v1057
    %v1059 = vmax.f32 %v818, %v821
    %v1060 = vrot.slane %v1059, 4
    %v1061 = vmax.f32 %v1059, %v1060
    %v1062 = vrot.slane %v1061, 2
    %v1063 = vmax.f32 %v1061, %v1062
    %v1064 = vrot.slane %v1063, 1
    %v1065 = vmax.f32 %v1063, %v1064
    %v1066 = vmax.f32 %v826, %v829
    %v1067 = vrot.slane %v1066, 4
    %v1068 = vmax.f32 %v1066, %v1067
    %v1069 = vrot.slane %v1068, 2
    %v1070 = vmax.f32 %v1068, %v1069
    %v1071 = vrot.slane %v1070, 1
    %v1072 = vmax.f32 %v1070, %v1071
    %v1073 = vmax.f32 %v834, %v837
    %v1074 = vrot.slane %v1073, 4
    %v1075 = vmax.f32 %v1073, %v1074
    %v1076 = vrot.slane %v1075, 2
    %v1077 = vmax.f32 %v1075, %v1076
    %v1078 = vrot.slane %v1077, 1
    %v1079 = vmax.f32 %v1077, %v1078
    %v1080 = vmax.f32 %v842, %v845
    %v1081 = vrot.slane %v1080, 4
    %v1082 = vmax.f32 %v1080, %v1081
    %v1083 = vrot.slane %v1082, 2
    %v1084 = vmax.f32 %v1082, %v1083
    %v1085 = vrot.slane %v1084, 1
    %v1086 = vmax.f32 %v1084, %v1085
    %v1087 = vmax.f32 %v850, %v853
    %v1088 = vrot.slane %v1087, 4
    %v1089 = vmax.f32 %v1087, %v1088
    %v1090 = vrot.slane %v1089, 2
    %v1091 = vmax.f32 %v1089, %v1090
    %v1092 = vrot.slane %v1091, 1
    %v1093 = vmax.f32 %v1091, %v1092
    %v1094 = vmax.f32 %v858, %v861
    %v1095 = vrot.slane %v1094, 4
    %v1096 = vmax.f32 %v1094, %v1095
    %v1097 = vrot.slane %v1096, 2
    %v1098 = vmax.f32 %v1096, %v1097
    %v1099 = vrot.slane %v1098, 1
    %v1100 = vmax.f32 %v1098, %v1099
    %v1101 = vmax.f32 %v866, %v869
    %v1102 = vrot.slane %v1101, 4
    %v1103 = vmax.f32 %v1101, %v1102
    %v1104 = vrot.slane %v1103, 2
    %v1105 = vmax.f32 %v1103, %v1104
    %v1106 = vrot.slane %v1105, 1
    %v1107 = vmax.f32 %v1105, %v1106
    %v1108 = vmax.f32 %v874, %v877
    %v1109 = vrot.slane %v1108, 4
    %v1110 = vmax.f32 %v1108, %v1109
    %v1111 = vrot.slane %v1110, 2
    %v1112 = vmax.f32 %v1110, %v1111
    %v1113 = vrot.slane %v1112, 1
    %v1114 = vmax.f32 %v1112, %v1113
    %v1115 = vmax.f32 %v882, %v885
    %v1116 = vrot.slane %v1115, 4
    %v1117 = vmax.f32 %v1115, %v1116
    %v1118 = vrot.slane %v1117, 2
    %v1119 = vmax.f32 %v1117, %v1118
    %v1120 = vrot.slane %v1119, 1
    %v1121 = vmax.f32 %v1119, %v1120
    %v1122 = vmax.f32 %v890, %v893
    %v1123 = vrot.slane %v1122, 4
    %v1124 = vmax.f32 %v1122, %v1123
    %v1125 = vrot.slane %v1124, 2
    %v1126 = vmax.f32 %v1124, %v1125
    %v1127 = vrot.slane %v1126, 1
    %v1128 = vmax.f32 %v1126, %v1127
    %v1129 = vmax.f32 %v898, %v901
    %v1130 = vrot.slane %v1129, 4
    %v1131 = vmax.f32 %v1129, %v1130
    %v1132 = vrot.slane %v1131, 2
    %v1133 = vmax.f32 %v1131, %v1132
    %v1134 = vrot.slane %v1133, 1
    %v1135 = vmax.f32 %v1133, %v1134
    %v1136 = vmax.f32 %v906, %v909
    %v1137 = vrot.slane %v1136, 4
    %v1138 = vmax.f32 %v1136, %v1137
    %v1139 = vrot.slane %v1138, 2
    %v1140 = vmax.f32 %v1138, %v1139
    %v1141 = vrot.slane %v1140, 1
    %v1142 = vmax.f32 %v1140, %v1141
    %v1143 = vmax.f32 %v914, %v917
    %v1144 = vrot.slane %v1143, 4
    %v1145 = vmax.f32 %v1143, %v1144
    %v1146 = vrot.slane %v1145, 2
    %v1147 = vmax.f32 %v1145, %v1146
    %v1148 = vrot.slane %v1147, 1
    %v1149 = vmax.f32 %v1147, %v1148
    %v1150 = vmax.f32 %v922, %v925
    %v1151 = vrot.slane %v1150, 4
    %v1152 = vmax.f32 %v1150, %v1151
    %v1153 = vrot.slane %v1152, 2
    %v1154 = vmax.f32 %v1152, %v1153
    %v1155 = vrot.slane %v1154, 1
    %v1156 = vmax.f32 %v1154, %v1155
    %v1157 = vmax.f32 %v930, %v933
    %v1158 = vrot.slane %v1157, 4
    %v1159 = vmax.f32 %v1157, %v1158
    %v1160 = vrot.slane %v1159, 2
    %v1161 = vmax.f32 %v1159, %v1160
    %v1162 = vrot.slane %v1161, 1
    %v1163 = vmax.f32 %v1161, %v1162
    %v1164 = vmax.f32 %v938, %v941
    %v1165 = vrot.slane %v1164, 4
    %v1166 = vmax.f32 %v1164, %v1165
    %v1167 = vrot.slane %v1166, 2
    %v1168 = vmax.f32 %v1166, %v1167
    %v1169 = vrot.slane %v1168, 1
    %v1170 = vmax.f32 %v1168, %v1169
    %v1171 = vmax.f32 %v946, %v949
    %v1172 = vrot.slane %v1171, 4
    %v1173 = vmax.f32 %v1171, %v1172
    %v1174 = vrot.slane %v1173, 2
    %v1175 = vmax.f32 %v1173, %v1174
    %v1176 = vrot.slane %v1175, 1
    %v1177 = vmax.f32 %v1175, %v1176
    %v1178 = vmax.f32 %v954, %v957
    %v1179 = vrot.slane %v1178, 4
    %v1180 = vmax.f32 %v1178, %v1179
    %v1181 = vrot.slane %v1180, 2
    %v1182 = vmax.f32 %v1180, %v1181
    %v1183 = vrot.slane %v1182, 1
    %v1184 = vmax.f32 %v1182, %v1183
    %v1185 = vmax.f32 %v962, %v965
    %v1186 = vrot.slane %v1185, 4
    %v1187 = vmax.f32 %v1185, %v1186
    %v1188 = vrot.slane %v1187, 2
    %v1189 = vmax.f32 %v1187, %v1188
    %v1190 = vrot.slane %v1189, 1
    %v1191 = vmax.f32 %v1189, %v1190
    %v1192 = vld [vmem:[%s4] sm:$0x1]
    %v1194 = vlaneseq
    %v1195 = vshrl.u32 %v1194, 7
    %v1196 = vsub.s32 0, %v1195
    %v1197 = vrot.slane %v1192, %v1196
    %v1199 = vadd.f32 %v974, %v1197
    %v1200 = vadd.f32 %v981, %v1197
    %v1201 = vadd.f32 %v988, %v1197
    %v1202 = vadd.f32 %v995, %v1197
    %v1203 = vadd.f32 %v1002, %v1197
    %v1204 = vadd.f32 %v1009, %v1197
    %v1205 = vadd.f32 %v1016, %v1197
    %v1206 = vadd.f32 %v1023, %v1197
    %v1207 = vadd.f32 %v1030, %v1197
    %v1208 = vadd.f32 %v1037, %v1197
    %v1209 = vadd.f32 %v1044, %v1197
    %v1210 = vadd.f32 %v1051, %v1197
    %v1211 = vadd.f32 %v1058, %v1197
    %v1212 = vadd.f32 %v1065, %v1197
    %v1213 = vadd.f32 %v1072, %v1197
    %v1214 = vadd.f32 %v1079, %v1197
    %v1215 = vadd.f32 %v1086, %v1197
    %v1216 = vadd.f32 %v1093, %v1197
    %v1217 = vadd.f32 %v1100, %v1197
    %v1218 = vadd.f32 %v1107, %v1197
    %v1219 = vadd.f32 %v1114, %v1197
    %v1220 = vadd.f32 %v1121, %v1197
    %v1221 = vadd.f32 %v1128, %v1197
    %v1222 = vadd.f32 %v1135, %v1197
    %v1223 = vadd.f32 %v1142, %v1197
    %v1224 = vadd.f32 %v1149, %v1197
    %v1225 = vadd.f32 %v1156, %v1197
    %v1226 = vadd.f32 %v1163, %v1197
    %v1227 = vadd.f32 %v1170, %v1197
    %v1228 = vadd.f32 %v1177, %v1197
    %v1229 = vadd.f32 %v1184, %v1197
    %v1230 = vadd.f32 %v1191, %v1197
    %v1231 = vmax.f32 %v1199, 0.0
    %v1232 = vmax.f32 %v1200, 0.0
    %v1233 = vmax.f32 %v1201, 0.0
    %v1234 = vmax.f32 %v1202, 0.0
    %v1235 = vmax.f32 %v1203, 0.0
    %v1236 = vmax.f32 %v1204, 0.0
    %v1237 = vmax.f32 %v1205, 0.0
    %v1238 = vmax.f32 %v1206, 0.0
    %v1239 = vmax.f32 %v1207, 0.0
    %v1240 = vmax.f32 %v1208, 0.0
    %v1241 = vmax.f32 %v1209, 0.0
    %v1242 = vmax.f32 %v1210, 0.0
    %v1243 = vmax.f32 %v1211, 0.0
    %v1244 = vmax.f32 %v1212, 0.0
    %v1245 = vmax.f32 %v1213, 0.0
    %v1246 = vmax.f32 %v1214, 0.0
    %v1247 = vmax.f32 %v1215, 0.0
    %v1248 = vmax.f32 %v1216, 0.0
    %v1249 = vmax.f32 %v1217, 0.0
    %v1250 = vmax.f32 %v1218, 0.0
    %v1251 = vmax.f32 %v1219, 0.0
    %v1252 = vmax.f32 %v1220, 0.0
    %v1253 = vmax.f32 %v1221, 0.0
    %v1254 = vmax.f32 %v1222, 0.0
    %v1255 = vmax.f32 %v1223, 0.0
    %v1256 = vmax.f32 %v1224, 0.0
    %v1257 = vmax.f32 %v1225, 0.0
    %v1258 = vmax.f32 %v1226, 0.0
    %v1259 = vmax.f32 %v1227, 0.0
    %v1260 = vmax.f32 %v1228, 0.0
    %v1261 = vmax.f32 %v1229, 0.0
    %v1262 = vmax.f32 %v1230, 0.0
    %v1295 = vrot.slane %v1232, 7
    %vm1296 = vcmask 1041409
    %v1297 = vsel %vm1296, %v1295, %v1231
    %v1298 = vrot.slane %v1233, 6
    %vm1299 = vcmask 1042434
    %v1300 = vsel %vm1299, %v1298, %v1297
    %v1301 = vrot.slane %v1234, 5
    %vm1302 = vcmask 1043459
    %v1303 = vsel %vm1302, %v1301, %v1300
    %v1304 = vrot.slane %v1235, 4
    %vm1305 = vcmask 1044484
    %v1306 = vsel %vm1305, %v1304, %v1303
    %v1307 = vrot.slane %v1236, 3
    %vm1308 = vcmask 1045509
    %v1309 = vsel %vm1308, %v1307, %v1306
    %v1310 = vrot.slane %v1237, 2
    %vm1311 = vcmask 1046534
    %v1312 = vsel %vm1311, %v1310, %v1309
    %v1313 = vrot.slane %v1238, 1
    %vm1314 = vcmask 1047559
    %v1315 = vsel %vm1314, %v1313, %v1312
    %v1316 = vrot.slane %v1240, 7
    %v1317 = vsel %vm1296, %v1316, %v1239
    %v1318 = vrot.slane %v1241, 6
    %v1319 = vsel %vm1299, %v1318, %v1317
    %v1320 = vrot.slane %v1242, 5
    %v1321 = vsel %vm1302, %v1320, %v1319
    %v1322 = vrot.slane %v1243, 4
    %v1323 = vsel %vm1305, %v1322, %v1321
    %v1324 = vrot.slane %v1244, 3
    %v1325 = vsel %vm1308, %v1324, %v1323
    %v1326 = vrot.slane %v1245, 2
    %v1327 = vsel %vm1311, %v1326, %v1325
    %v1328 = vrot.slane %v1246, 1
    %v1329 = vsel %vm1314, %v1328, %v1327
    %v1330 = vrot.slane %v1248, 7
    %v1331 = vsel %vm1296, %v1330, %v1247
    %v1332 = vrot.slane %v1249, 6
    %v1333 = vsel %vm1299, %v1332, %v1331
    %v1334 = vrot.slane %v1250, 5
    %v1335 = vsel %vm1302, %v1334, %v1333
    %v1336 = vrot.slane %v1251, 4
    %v1337 = vsel %vm1305, %v1336, %v1335
    %v1338 = vrot.slane %v1252, 3
    %v1339 = vsel %vm1308, %v1338, %v1337
    %v1340 = vrot.slane %v1253, 2
    %v1341 = vsel %vm1311, %v1340, %v1339
    %v1342 = vrot.slane %v1254, 1
    %v1343 = vsel %vm1314, %v1342, %v1341
    %v1344 = vrot.slane %v1256, 7
    %v1345 = vsel %vm1296, %v1344, %v1255
    %v1346 = vrot.slane %v1257, 6
    %v1347 = vsel %vm1299, %v1346, %v1345
    %v1348 = vrot.slane %v1258, 5
    %v1349 = vsel %vm1302, %v1348, %v1347
    %v1350 = vrot.slane %v1259, 4
    %v1351 = vsel %vm1305, %v1350, %v1349
    %v1352 = vrot.slane %v1260, 3
    %v1353 = vsel %vm1308, %v1352, %v1351
    %v1354 = vrot.slane %v1261, 2
    %v1355 = vsel %vm1311, %v1354, %v1353
    %v1356 = vrot.slane %v1262, 1
    %v1357 = vsel %vm1314, %v1356, %v1355
    %1362 = vst [vmem:[#allocation2] sm:$0xff] %v1315
    %1363 = vst [vmem:[#allocation2 + $0x8] sm:$0xff] %v1329
    %1364 = vst [vmem:[#allocation2 + $0x10] sm:$0xff] %v1343
    %1365 = vst [vmem:[#allocation2 + $0x18] sm:$0xff] %v1357
    // Predicated region
    $region22: #{tpu_custom_call.1} parent=1 // pred_check
      _
    $region23: #{tpu_custom_call.1} parent=1 // pred_check_branch
      %1367 = sbr.rel (0) target = $region25
    $region24: #{tpu_custom_call.1} parent=1 // pred_region
      %s1369 = ssub.s32 512, 512
      %1370 = vsyncadd [#allocation3], %s1369
      %s1371 = sshll.u32 [#allocation2], 4
      %s1372 = int_to_ptr.vmem [resolvable:$true] %s1371
      %1377 = dma.vmem_to_hbm [thread:$0]  %s1372, 512, %s5, [#allocation3], 128, 128, 8
    $region25: #{tpu_custom_call.1} parent=1 // pred_fallthru
      _
    // Predicated region
    $region26: #{tpu_custom_call.1} parent=1 // pred_check
      _
    $region27: #{tpu_custom_call.1} parent=1 // pred_check_branch
      %1379 = sbr.rel (0) target = $region29
    $region28: #{tpu_custom_call.1} parent=1 // pred_region
      %1380 = dma.done [#allocation3], 512
    $region29: #{tpu_custom_call.1} parent=1 // pred_fallthru
      _
    %1381 = vsyncpa [#allocation3], 1

</llo_original>
